<compile_context>
chip_gen: v5e
topology: v5e:2x2
jax: 0.10.0
libtpu: 0.0.40
codegen_flags: <defaults>
</compile_context>

<pallas_src>
import functools

import jax
import jax.numpy as jnp
from jax.experimental import pallas as pl
from jax.experimental.pallas import tpu as pltpu

EPS = 1e-12                      # F.normalize default eps
_SINGLE_SHOT_BUDGET = 24 << 20   # stay under the 32 MiB scoped default (v6e/v7x)
_VMEM_LIMIT_CAP = 32 << 20       # safe on v5e / v6e / v7x


def _l2_normalize_rows(emb):
    """Row-wise L2 normalize with the F.normalize clamp: x / max(||x||, eps).
    rsqrt lowers to the EUP slot instead of a VALU divide."""
    sq = jnp.sum(emb * emb, axis=1, keepdims=True)
    inv = jnp.where(sq > EPS * EPS, jax.lax.rsqrt(sq), 1.0 / EPS)
    return emb * inv


def _facenet_single_kernel(x_ref, w_ref, b_ref, o_ref):
    """Whole problem in one invocation: matmul + bias + L2 normalize."""
    emb = jnp.dot(x_ref[...], w_ref[...], preferred_element_type=jnp.float32)
    emb = emb + b_ref[...]
    o_ref[...] = _l2_normalize_rows(emb).astype(o_ref.dtype)


def _facenet_tiled_kernel(x_ref, w_ref, b_ref, o_ref):
    """grid = (B//tb, K//tk): batch-parallel axis first, K reduction last.
    Accumulates directly into the resident f32 output block (same output block
    index across the K axis), then fuses bias + normalize on the last K step."""
    k = pl.program_id(1)

    @pl.when(k == 0)
    def _():
        o_ref[...] = jnp.zeros_like(o_ref)

    o_ref[...] += jnp.dot(
        x_ref[...], w_ref[...], preferred_element_type=jnp.float32
    )

    @pl.when(k == pl.num_programs(1) - 1)
    def _():
        emb = o_ref[...] + b_ref[...]
        o_ref[...] = _l2_normalize_rows(emb)


@functools.partial(jax.jit, static_argnames=("tk", "compute_dtype", "force_tiled"))
def wrapped_distortion_facenet(x_nchw, weight, bias, *, tk=512,
                               compute_dtype=None, force_tiled=False):
    """x_nchw: [B, C, H, W], weight: [K, D] (K = C*H*W), bias: [D].
    Returns f32 L2-normalized embeddings [B, D] == F.normalize(model(x), dim=1)."""
    B = x_nchw.shape[0]
    K, D = weight.shape
    # Keep the output lane-dense; pad D in the wrapper if a future head isn't.
    assert D % 128 == 0, "pad the embedding dim to a multiple of 128 in the wrapper"

    x_flat = x_nchw.reshape(B, K)                  # glue reshape in plain JAX
    if compute_dtype is not None:                  # e.g. jnp.bfloat16 weight stream
        x_flat = x_flat.astype(compute_dtype)
        weight = weight.astype(compute_dtype)
    bias2d = bias.reshape(1, D).astype(jnp.float32)
    itemsize = jnp.dtype(x_flat.dtype).itemsize

    # VMEM footprint if we load everything at once (x2 for pipelining buffers).
    single_bytes = 2 * ((B * K + K * D) * itemsize + B * D * 4 + D * 4)
    use_single = (not force_tiled) and single_bytes <= _SINGLE_SHOT_BUDGET

    if use_single:
        grid_spec = pltpu.PrefetchScalarGridSpec(
            num_scalar_prefetch=0,
            grid=(1,),
            in_specs=[
                pl.BlockSpec((B, K), lambda i: (0, 0)),   # activations
                pl.BlockSpec((K, D), lambda i: (0, 0)),   # weight
                pl.BlockSpec((1, D), lambda i: (0, 0)),   # bias
            ],
            out_specs=pl.BlockSpec((B, D), lambda i: (0, 0)),
        )
        kernel = _facenet_single_kernel
        semantics = ("arbitrary",)
        est_bytes = single_bytes
    else:
        tk = min(tk, K)
        assert K % tk == 0, "reduction dim must be divisible by the K tile"
        # Batch tile: large B feeds v7x megacore; small B stays a single block.
        tb = 128 if (B >= 256 and B % 128 == 0) else B
        grid_spec = pltpu.PrefetchScalarGridSpec(
            num_scalar_prefetch=0,
            grid=(B // tb, K // tk),
            in_specs=[
                pl.BlockSpec((tb, tk), lambda b, k: (b, k)),   # activations tile
                pl.BlockSpec((tk, D), lambda b, k: (k, 0)),    # weight tile
                pl.BlockSpec((1, D), lambda b, k: (0, 0)),     # bias (resident)
            ],
            out_specs=pl.BlockSpec((tb, D), lambda b, k: (b, 0)),  # resident acc
        )
        kernel = _facenet_tiled_kernel
        semantics = ("parallel", "arbitrary")
        est_bytes = 2 * (tb * tk + tk * D) * itemsize + tb * D * 4 + 2 * D * 4

    vmem_limit = int(min(_VMEM_LIMIT_CAP, max(16 << 20, est_bytes + (2 << 20))))
    return pl.pallas_call(
        kernel,
        out_shape=jax.ShapeDtypeStruct((B, D), jnp.float32),
        grid_spec=grid_spec,
        compiler_params=pltpu.CompilerParams(
            dimension_semantics=semantics,
            vmem_limit_bytes=vmem_limit,
        ),
    )(x_flat, weight, bias2d)


def _reference(x_nchw, weight, bias):
    """Pure-JAX reference of model(x) -> F.normalize(dim=1)."""
    B = x_nchw.shape[0]
    emb = x_nchw.reshape(B, -1) @ weight + bias
    norm = jnp.maximum(jnp.linalg.norm(emb, axis=1, keepdims=True), EPS)
    return emb / norm


if __name__ == "__main__":
    # Small shapes consistent with an NCHW image input and an embedding head.
    B, C, H, W = 2, 4, 16, 16          # input image batch
    K = C * H * W                      # 1024 flattened features
    D = 128                            # embedding dimension

    key = jax.random.PRNGKey(0)
    kx, kw, kb = jax.random.split(key, 3)
    x = jax.random.normal(kx, (B, C, H, W), dtype=jnp.float32)
    # Deterministic synthetic backbone parameters (no checkpoint load).
    weight = jax.random.normal(kw, (K, D), dtype=jnp.float32) * (1.0 / jnp.sqrt(K))
    bias = jax.random.normal(kb, (D,), dtype=jnp.float32) * 0.01

    ref = _reference(x, weight, bias)

    # 1) f32 single-shot path (auto-selected at these sizes: no grid overhead).
    out = jax.block_until_ready(wrapped_distortion_facenet(x, weight, bias))
    assert out.shape == (B, D)
    assert jnp.allclose(out, ref, atol=1e-5, rtol=1e-5), "single-shot mismatch"
    assert jnp.allclose(jnp.linalg.norm(out, axis=1), 1.0, atol=1e-4)

    # 2) f32 K-tiled + batch-parallel path (the large-backbone fallback).
    out_t = jax.block_until_ready(
        wrapped_distortion_facenet(x, weight, bias, tk=512, force_tiled=True))
    assert jnp.allclose(out_t, ref, atol=1e-5, rtol=1e-5), "tiled mismatch"
    assert jnp.allclose(jnp.linalg.norm(out_t, axis=1), 1.0, atol=1e-4)

    # 3) bf16 weight-stream path (halves HBM bytes; f32 accumulate + output).
    out_bf = jax.block_until_ready(
        wrapped_distortion_facenet(x, weight, bias, compute_dtype=jnp.bfloat16))
    assert jnp.allclose(out_bf, ref, atol=2e-2, rtol=2e-2), "bf16 mismatch"
    assert jnp.allclose(jnp.linalg.norm(out_bf, axis=1), 1.0, atol=1e-3)

    print("KERNEL_OK")
</pallas_src>

<mosaic_0001>
module attributes {stable_mosaic.version = 11 : i64} {
  func.func @_facenet_single_kernel(%arg0: i32, %arg1: memref<2x1024xf32, #tpu.memory_space<vmem>>, %arg2: memref<1024x128xf32, #tpu.memory_space<vmem>>, %arg3: memref<1x128xf32, #tpu.memory_space<vmem>>, %arg4: memref<2x128xf32, #tpu.memory_space<vmem>>) attributes {dimension_semantics = [#tpu.dimension_semantics<arbitrary>], iteration_bounds = array<i64: 1>, scalar_prefetch = 0 : i64, scratch_operands = 0 : i64, tpu.core_type = #tpu.core_type<tc>, window_params = [{pipeline_mode = #tpu.pipeline_mode<synchronous>, transform_indices = @transform_0, window_bounds = array<i64: 2, 1024>}, {pipeline_mode = #tpu.pipeline_mode<synchronous>, transform_indices = @transform_1, window_bounds = array<i64: 1024, 128>}, {pipeline_mode = #tpu.pipeline_mode<synchronous>, transform_indices = @transform_2, window_bounds = array<i64: 1, 128>}, {pipeline_mode = #tpu.pipeline_mode<synchronous>, transform_indices = @transform_3, window_bounds = array<i64: 2, 128>}]} {
    %c0 = arith.constant 0 : index
    %c0_0 = arith.constant 0 : index
    %0 = vector.load %arg1[%c0, %c0_0] : memref<2x1024xf32, #tpu.memory_space<vmem>>, vector<2x1024xf32>
    %c0_1 = arith.constant 0 : index
    %c0_2 = arith.constant 0 : index
    %1 = vector.load %arg2[%c0_1, %c0_2] : memref<1024x128xf32, #tpu.memory_space<vmem>>, vector<1024x128xf32>
    %cst = arith.constant dense<0.000000e+00> : vector<2x128xf32>
    %2 = tpu.matmul %0, %1, %cst {dimension_numbers = #tpu.dot_dimension_numbers<[1], [0], [0], [1], [0, 0, 1, 1], [], []>} : vector<2x1024xf32>, vector<1024x128xf32>, vector<2x128xf32> -> vector<2x128xf32>
    %c0_3 = arith.constant 0 : index
    %c0_4 = arith.constant 0 : index
    %3 = vector.load %arg3[%c0_3, %c0_4] : memref<1x128xf32, #tpu.memory_space<vmem>>, vector<1x128xf32>
    %4 = vector.broadcast %3 : vector<1x128xf32> to vector<2x128xf32>
    %5 = arith.addf %2, %4 : vector<2x128xf32>
    %6 = arith.mulf %5, %5 : vector<2x128xf32>
    %cst_5 = arith.constant dense<0.000000e+00> : vector<2xf32>
    %7 = vector.multi_reduction <add>, %6, %cst_5 [1] : vector<2x128xf32> to vector<2xf32>
    %8 = vector.shape_cast %7 : vector<2xf32> to vector<2x1xf32>
    %cst_6 = arith.constant 1.000000e-24 : f32
    %9 = vector.broadcast %cst_6 : f32 to vector<2x1xf32>
    %10 = arith.cmpf ogt, %8, %9 : vector<2x1xf32>
    %11 = math.rsqrt %8 : vector<2x1xf32>
    %cst_7 = arith.constant 9.99999995E+11 : f32
    %12 = vector.broadcast %cst_7 : f32 to vector<2x1xf32>
    %13 = arith.select %10, %11, %12 : vector<2x1xi1>, vector<2x1xf32>
    %14 = vector.broadcast %13 : vector<2x1xf32> to vector<2x128xf32>
    %15 = arith.mulf %5, %14 : vector<2x128xf32>
    %c0_8 = arith.constant 0 : index
    %c0_9 = arith.constant 0 : index
    %16 = vector.load %arg4[%c0_8, %c0_9] : memref<2x128xf32, #tpu.memory_space<vmem>>, vector<2x128xf32>
    tpu.vector_store %arg4[%c0_8, %c0_9], %15 {strides = array<i32>} : memref<2x128xf32, #tpu.memory_space<vmem>>, vector<2x128xf32>,
    return
  }
  func.func @transform_0(%arg0: i32) -> (i32, i32) {
    %c0_i32 = arith.constant 0 : i32
    %c0_i32_0 = arith.constant 0 : i32
    %c0_i32_1 = arith.constant 0 : i32
    return %c0_i32, %c0_i32_0 : i32, i32
  }
  func.func @transform_1(%arg0: i32) -> (i32, i32) {
    %c0_i32 = arith.constant 0 : i32
    %c0_i32_0 = arith.constant 0 : i32
    %c0_i32_1 = arith.constant 0 : i32
    return %c0_i32, %c0_i32_0 : i32, i32
  }
  func.func @transform_2(%arg0: i32) -> (i32, i32) {
    %c0_i32 = arith.constant 0 : i32
    %c0_i32_0 = arith.constant 0 : i32
    %c0_i32_1 = arith.constant 0 : i32
    return %c0_i32, %c0_i32_0 : i32, i32
  }
  func.func @transform_3(%arg0: i32) -> (i32, i32) {
    %c0_i32 = arith.constant 0 : i32
    %c0_i32_0 = arith.constant 0 : i32
    %c0_i32_1 = arith.constant 0 : i32
    return %c0_i32, %c0_i32_0 : i32, i32
  }
}

</mosaic_0001>

<llo_original>
// kernel: wrapped_distortion_facenet.1
$region0: #{wrapped_distortion_facenet.1}
  #allocation0 [shape = 'u32[]', space=smem, size = 0x4, offset = 0x4, fixed_abs, tag = 'smem constant byte address 0x4 - core index']
  #allocation1 [shape = 'u32[72,128]{1,0:T(1,128)}', space=vmem, size = 0x9000, scoped, tag = 'internal scratch']
  %s0 = inlined_call_operand.vmem [shape: f32[2,1024], index: 0, kind: input, shape index: {}]
  %s1 = inlined_call_operand.hbm [shape: f32[1024,128], index: 1, kind: input, shape index: {}]
  %s2 = inlined_call_operand.vmem [shape: f32[1,128], index: 2, kind: input, shape index: {}]
  %s3 = inlined_call_operand.hbm [shape: f32[2,128], index: 3, kind: output, shape index: {}]
  %s4 = sld [smem:[#allocation0]]
  $region26: #{wrapped_distortion_facenet.1} parent=0
    _
  %s6 = ssub.s32 1, %s4
  %s7 = scalar_select 0, %s6, %s4
  $region1: #{wrapped_distortion_facenet.1} parent=0
    #allocation2 [shape = 'u8[524288]{0}', space=vmem, size = 0x80000, scoped, tag = 'input window, operand 1, single buffered']
    #allocation3 [shape = 's32[1]{0}', space=sflag, size = 0x4, scoped, tag = 'scoped memory for wrapped_distortion_facenet.1']
    #allocation4 [shape = 's32[1]{0}', space=sflag, size = 0x4, scoped, tag = 'scoped memory for wrapped_distortion_facenet.1']
    #allocation5 [shape = 'u8[1024]{0}', space=vmem, size = 0x400, scoped, tag = 'output window, operand 0, single buffered']
    %8 = vsyncpa [#allocation3], 0
    %9 = vsyncpa [#allocation4], 0
    // Predicated region
    $region2: #{wrapped_distortion_facenet.1} parent=1 // pred_check
      _
    $region3: #{wrapped_distortion_facenet.1} parent=1 // pred_check_branch
      %11 = sbr.rel (0) target = $region5
    $region4: #{wrapped_distortion_facenet.1} parent=1 // pred_region
      _
    $region5: #{wrapped_distortion_facenet.1} parent=1 // pred_fallthru
      _
    // Predicated region
    $region6: #{wrapped_distortion_facenet.1} parent=1 // pred_check
      _
    $region7: #{wrapped_distortion_facenet.1} parent=1 // pred_check_branch
      %13 = sbr.rel (0) target = $region9
    $region8: #{wrapped_distortion_facenet.1} parent=1 // pred_region
      %15 = vsyncadd [#allocation3], 0
      %s16 = sshll.u32 %s1, 4
      %s17 = int_to_ptr.hbm [resolvable:$true] %s16
      %s18 = sshll.u32 [#allocation2], 4
      %s19 = int_to_ptr.vmem [resolvable:$true] %s18
      %24 = dma.hbm_to_vmem [thread:$0]  %s17, 16384, %s19, [#allocation3], 128, 128, 8
    $region9: #{wrapped_distortion_facenet.1} parent=1 // pred_fallthru
      _
    // Predicated region
    $region10: #{wrapped_distortion_facenet.1} parent=1 // pred_check
      _
    $region11: #{wrapped_distortion_facenet.1} parent=1 // pred_check_branch
      %26 = sbr.rel (0) target = $region13
    $region12: #{wrapped_distortion_facenet.1} parent=1 // pred_region
      _
    $region13: #{wrapped_distortion_facenet.1} parent=1 // pred_fallthru
      _
    // Predicated region
    $region14: #{wrapped_distortion_facenet.1} parent=1 // pred_check
      _
    $region15: #{wrapped_distortion_facenet.1} parent=1 // pred_check_branch
      %28 = sbr.rel (0) target = $region17
    $region16: #{wrapped_distortion_facenet.1} parent=1 // pred_region
      %30 = dma.done [#allocation3], 16384
    $region17: #{wrapped_distortion_facenet.1} parent=1 // pred_fallthru
      _
    %v31 = vld [vmem:[%s0] sm:$0xff]
    %v32 = vld [vmem:[%s0 + $0x8] sm:$0xff]
    %v33 = vld [vmem:[#allocation2] sm:$0xff]
    %v34 = vld [vmem:[#allocation2 + $0x8] sm:$0xff]
    %v35 = vld [vmem:[#allocation2 + $0x10] sm:$0xff]
    %v36 = vld [vmem:[#allocation2 + $0x18] sm:$0xff]
    %v37 = vld [vmem:[#allocation2 + $0x20] sm:$0xff]
    %v38 = vld [vmem:[#allocation2 + $0x28] sm:$0xff]
    %v39 = vld [vmem:[#allocation2 + $0x30] sm:$0xff]
    %v40 = vld [vmem:[#allocation2 + $0x38] sm:$0xff]
    %v41 = vld [vmem:[#allocation2 + $0x40] sm:$0xff]
    %v42 = vld [vmem:[#allocation2 + $0x48] sm:$0xff]
    %v43 = vld [vmem:[#allocation2 + $0x50] sm:$0xff]
    %v44 = vld [vmem:[#allocation2 + $0x58] sm:$0xff]
    %v45 = vld [vmem:[#allocation2 + $0x60] sm:$0xff]
    %v46 = vld [vmem:[#allocation2 + $0x68] sm:$0xff]
    %v47 = vld [vmem:[#allocation2 + $0x70] sm:$0xff]
    %v48 = vld [vmem:[#allocation2 + $0x78] sm:$0xff]
    %v49 = vld [vmem:[#allocation2 + $0x80] sm:$0xff]
    %v50 = vld [vmem:[#allocation2 + $0x88] sm:$0xff]
    %v51 = vld [vmem:[#allocation2 + $0x90] sm:$0xff]
    %v52 = vld [vmem:[#allocation2 + $0x98] sm:$0xff]
    %v53 = vld [vmem:[#allocation2 + $0xa0] sm:$0xff]
    %v54 = vld [vmem:[#allocation2 + $0xa8] sm:$0xff]
    %v55 = vld [vmem:[#allocation2 + $0xb0] sm:$0xff]
    %v56 = vld [vmem:[#allocation2 + $0xb8] sm:$0xff]
    %v57 = vld [vmem:[#allocation2 + $0xc0] sm:$0xff]
    %v58 = vld [vmem:[#allocation2 + $0xc8] sm:$0xff]
    %v59 = vld [vmem:[#allocation2 + $0xd0] sm:$0xff]
    %v60 = vld [vmem:[#allocation2 + $0xd8] sm:$0xff]
    %v61 = vld [vmem:[#allocation2 + $0xe0] sm:$0xff]
    %v62 = vld [vmem:[#allocation2 + $0xe8] sm:$0xff]
    %v63 = vld [vmem:[#allocation2 + $0xf0] sm:$0xff]
    %v64 = vld [vmem:[#allocation2 + $0xf8] sm:$0xff]
    %v65 = vld [vmem:[#allocation2 + $0x100] sm:$0xff]
    %v66 = vld [vmem:[#allocation2 + $0x108] sm:$0xff]
    %v67 = vld [vmem:[#allocation2 + $0x110] sm:$0xff]
    %v68 = vld [vmem:[#allocation2 + $0x118] sm:$0xff]
    %v69 = vld [vmem:[#allocation2 + $0x120] sm:$0xff]
    %v70 = vld [vmem:[#allocation2 + $0x128] sm:$0xff]
    %v71 = vld [vmem:[#allocation2 + $0x130] sm:$0xff]
    %v72 = vld [vmem:[#allocation2 + $0x138] sm:$0xff]
    %v73 = vld [vmem:[#allocation2 + $0x140] sm:$0xff]
    %v74 = vld [vmem:[#allocation2 + $0x148] sm:$0xff]
    %v75 = vld [vmem:[#allocation2 + $0x150] sm:$0xff]
    %v76 = vld [vmem:[#allocation2 + $0x158] sm:$0xff]
    %v77 = vld [vmem:[#allocation2 + $0x160] sm:$0xff]
    %v78 = vld [vmem:[#allocation2 + $0x168] sm:$0xff]
    %v79 = vld [vmem:[#allocation2 + $0x170] sm:$0xff]
    %v80 = vld [vmem:[#allocation2 + $0x178] sm:$0xff]
    %v81 = vld [vmem:[#allocation2 + $0x180] sm:$0xff]
    %v82 = vld [vmem:[#allocation2 + $0x188] sm:$0xff]
    %v83 = vld [vmem:[#allocation2 + $0x190] sm:$0xff]
    %v84 = vld [vmem:[#allocation2 + $0x198] sm:$0xff]
    %v85 = vld [vmem:[#allocation2 + $0x1a0] sm:$0xff]
    %v86 = vld [vmem:[#allocation2 + $0x1a8] sm:$0xff]
    %v87 = vld [vmem:[#allocation2 + $0x1b0] sm:$0xff]
    %v88 = vld [vmem:[#allocation2 + $0x1b8] sm:$0xff]
    %v89 = vld [vmem:[#allocation2 + $0x1c0] sm:$0xff]
    %v90 = vld [vmem:[#allocation2 + $0x1c8] sm:$0xff]
    %v91 = vld [vmem:[#allocation2 + $0x1d0] sm:$0xff]
    %v92 = vld [vmem:[#allocation2 + $0x1d8] sm:$0xff]
    %v93 = vld [vmem:[#allocation2 + $0x1e0] sm:$0xff]
    %v94 = vld [vmem:[#allocation2 + $0x1e8] sm:$0xff]
    %v95 = vld [vmem:[#allocation2 + $0x1f0] sm:$0xff]
    %v96 = vld [vmem:[#allocation2 + $0x1f8] sm:$0xff]
    %v97 = vld [vmem:[#allocation2 + $0x200] sm:$0xff]
    %v98 = vld [vmem:[#allocation2 + $0x208] sm:$0xff]
    %v99 = vld [vmem:[#allocation2 + $0x210] sm:$0xff]
    %v100 = vld [vmem:[#allocation2 + $0x218] sm:$0xff]
    %v101 = vld [vmem:[#allocation2 + $0x220] sm:$0xff]
    %v102 = vld [vmem:[#allocation2 + $0x228] sm:$0xff]
    %v103 = vld [vmem:[#allocation2 + $0x230] sm:$0xff]
    %v104 = vld [vmem:[#allocation2 + $0x238] sm:$0xff]
    %v105 = vld [vmem:[#allocation2 + $0x240] sm:$0xff]
    %v106 = vld [vmem:[#allocation2 + $0x248] sm:$0xff]
    %v107 = vld [vmem:[#allocation2 + $0x250] sm:$0xff]
    %v108 = vld [vmem:[#allocation2 + $0x258] sm:$0xff]
    %v109 = vld [vmem:[#allocation2 + $0x260] sm:$0xff]
    %v110 = vld [vmem:[#allocation2 + $0x268] sm:$0xff]
    %v111 = vld [vmem:[#allocation2 + $0x270] sm:$0xff]
    %v112 = vld [vmem:[#allocation2 + $0x278] sm:$0xff]
    %v113 = vld [vmem:[#allocation2 + $0x280] sm:$0xff]
    %v114 = vld [vmem:[#allocation2 + $0x288] sm:$0xff]
    %v115 = vld [vmem:[#allocation2 + $0x290] sm:$0xff]
    %v116 = vld [vmem:[#allocation2 + $0x298] sm:$0xff]
    %v117 = vld [vmem:[#allocation2 + $0x2a0] sm:$0xff]
    %v118 = vld [vmem:[#allocation2 + $0x2a8] sm:$0xff]
    %v119 = vld [vmem:[#allocation2 + $0x2b0] sm:$0xff]
    %v120 = vld [vmem:[#allocation2 + $0x2b8] sm:$0xff]
    %v121 = vld [vmem:[#allocation2 + $0x2c0] sm:$0xff]
    %v122 = vld [vmem:[#allocation2 + $0x2c8] sm:$0xff]
    %v123 = vld [vmem:[#allocation2 + $0x2d0] sm:$0xff]
    %v124 = vld [vmem:[#allocation2 + $0x2d8] sm:$0xff]
    %v125 = vld [vmem:[#allocation2 + $0x2e0] sm:$0xff]
    %v126 = vld [vmem:[#allocation2 + $0x2e8] sm:$0xff]
    %v127 = vld [vmem:[#allocation2 + $0x2f0] sm:$0xff]
    %v128 = vld [vmem:[#allocation2 + $0x2f8] sm:$0xff]
    %v129 = vld [vmem:[#allocation2 + $0x300] sm:$0xff]
    %v130 = vld [vmem:[#allocation2 + $0x308] sm:$0xff]
    %v131 = vld [vmem:[#allocation2 + $0x310] sm:$0xff]
    %v132 = vld [vmem:[#allocation2 + $0x318] sm:$0xff]
    %v133 = vld [vmem:[#allocation2 + $0x320] sm:$0xff]
    %v134 = vld [vmem:[#allocation2 + $0x328] sm:$0xff]
    %v135 = vld [vmem:[#allocation2 + $0x330] sm:$0xff]
    %v136 = vld [vmem:[#allocation2 + $0x338] sm:$0xff]
    %v137 = vld [vmem:[#allocation2 + $0x340] sm:$0xff]
    %v138 = vld [vmem:[#allocation2 + $0x348] sm:$0xff]
    %v139 = vld [vmem:[#allocation2 + $0x350] sm:$0xff]
    %v140 = vld [vmem:[#allocation2 + $0x358] sm:$0xff]
    %v141 = vld [vmem:[#allocation2 + $0x360] sm:$0xff]
    %v142 = vld [vmem:[#allocation2 + $0x368] sm:$0xff]
    %v143 = vld [vmem:[#allocation2 + $0x370] sm:$0xff]
    %v144 = vld [vmem:[#allocation2 + $0x378] sm:$0xff]
    %v145 = vld [vmem:[#allocation2 + $0x380] sm:$0xff]
    %v146 = vld [vmem:[#allocation2 + $0x388] sm:$0xff]
    %v147 = vld [vmem:[#allocation2 + $0x390] sm:$0xff]
    %v148 = vld [vmem:[#allocation2 + $0x398] sm:$0xff]
    %v149 = vld [vmem:[#allocation2 + $0x3a0] sm:$0xff]
    %v150 = vld [vmem:[#allocation2 + $0x3a8] sm:$0xff]
    %v151 = vld [vmem:[#allocation2 + $0x3b0] sm:$0xff]
    %v152 = vld [vmem:[#allocation2 + $0x3b8] sm:$0xff]
    %v153 = vld [vmem:[#allocation2 + $0x3c0] sm:$0xff]
    %v154 = vld [vmem:[#allocation2 + $0x3c8] sm:$0xff]
    %v155 = vld [vmem:[#allocation2 + $0x3d0] sm:$0xff]
    %v156 = vld [vmem:[#allocation2 + $0x3d8] sm:$0xff]
    %v157 = vld [vmem:[#allocation2 + $0x3e0] sm:$0xff]
    %v158 = vld [vmem:[#allocation2 + $0x3e8] sm:$0xff]
    %v159 = vld [vmem:[#allocation2 + $0x3f0] sm:$0xff]
    %v160 = vld [vmem:[#allocation2 + $0x3f8] sm:$0xff]
    %v161 = vld [vmem:[%s2] sm:$0x1]
    %v163 = vperm.slane %v161, 0
    %167 = vst [vmem:[#allocation1] ss:$4 sm:$0xff] %v31
    %s168 = scalar_lea.vmem [#allocation1], 32
    %169 = vst [vmem:[%s168] ss:$4 sm:$0xff] %v32
    %v170 = vld.sshfl [vmem:[#allocation1] sm:$0xff pattern:$0x73625140]
    %v171 = vld.sshfl [vmem:[#allocation1 + $0x8] sm:$0xff pattern:$0x73625140]
    %v172 = vld.sshfl [vmem:[#allocation1 + $0x10] sm:$0xff pattern:$0x73625140]
    %v173 = vld.sshfl [vmem:[#allocation1 + $0x18] sm:$0xff pattern:$0x73625140]
    %v174 = vld.sshfl [vmem:[#allocation1 + $0x20] sm:$0xff pattern:$0x73625140]
    %v175 = vld.sshfl [vmem:[#allocation1 + $0x28] sm:$0xff pattern:$0x73625140]
    %v176 = vld.sshfl [vmem:[#allocation1 + $0x30] sm:$0xff pattern:$0x73625140]
    %v177 = vld.sshfl [vmem:[#allocation1 + $0x38] sm:$0xff pattern:$0x73625140]
    %186 = vmatpush.msra.mxu0 %v48
    %187 = vmatpush.msra.mxu0 %v47
    %188 = vmatpush.msra.mxu0 %v46
    %189 = vmatpush.msra.mxu0 %v45
    %190 = vmatpush.msra.mxu0 %v44
    %191 = vmatpush.msra.mxu0 %v43
    %192 = vmatpush.msra.mxu0 %v42
    %193 = vmatpush.msra.mxu0 %v41
    %194 = vmatpush.msra.mxu0 %v40
    %195 = vmatpush.msra.mxu0 %v39
    %196 = vmatpush.msra.mxu0 %v38
    %197 = vmatpush.msra.mxu0 %v37
    %198 = vmatpush.msra.mxu0 %v36
    %199 = vmatpush.msra.mxu0 %v35
    %200 = vmatpush.msra.mxu0 %v34
    %201 = vmatpush.msra.mxu0 %v33
    %202 = vmatmul.f32.gmra.mxu0 %v170
    %v203 = vpop.f32.mrf.mxu0
    %v204 = vadd.f32 %v163, %v203
    %205 = vdwg.mxu0
    %206 = vmatpush.msra.mxu0 %v64
    %207 = vmatpush.msra.mxu0 %v63
    %208 = vmatpush.msra.mxu0 %v62
    %209 = vmatpush.msra.mxu0 %v61
    %210 = vmatpush.msra.mxu0 %v60
    %211 = vmatpush.msra.mxu0 %v59
    %212 = vmatpush.msra.mxu0 %v58
    %213 = vmatpush.msra.mxu0 %v57
    %214 = vmatpush.msra.mxu0 %v56
    %215 = vmatpush.msra.mxu0 %v55
    %216 = vmatpush.msra.mxu0 %v54
    %217 = vmatpush.msra.mxu0 %v53
    %218 = vmatpush.msra.mxu0 %v52
    %219 = vmatpush.msra.mxu0 %v51
    %220 = vmatpush.msra.mxu0 %v50
    %221 = vmatpush.msra.mxu0 %v49
    %222 = vmatmul.f32.gmra.mxu0 %v171
    %v223 = vpop.f32.mrf.mxu0
    %v224 = vadd.f32 %v204, %v223
    %225 = vdwg.mxu0
    %226 = vmatpush.msra.mxu0 %v80
    %227 = vmatpush.msra.mxu0 %v79
    %228 = vmatpush.msra.mxu0 %v78
    %229 = vmatpush.msra.mxu0 %v77
    %230 = vmatpush.msra.mxu0 %v76
    %231 = vmatpush.msra.mxu0 %v75
    %232 = vmatpush.msra.mxu0 %v74
    %233 = vmatpush.msra.mxu0 %v73
    %234 = vmatpush.msra.mxu0 %v72
    %235 = vmatpush.msra.mxu0 %v71
    %236 = vmatpush.msra.mxu0 %v70
    %237 = vmatpush.msra.mxu0 %v69
    %238 = vmatpush.msra.mxu0 %v68
    %239 = vmatpush.msra.mxu0 %v67
    %240 = vmatpush.msra.mxu0 %v66
    %241 = vmatpush.msra.mxu0 %v65
    %242 = vmatmul.f32.gmra.mxu0 %v172
    %v243 = vpop.f32.mrf.mxu0
    %v244 = vadd.f32 %v224, %v243
    %245 = vdwg.mxu0
    %246 = vmatpush.msra.mxu0 %v96
    %247 = vmatpush.msra.mxu0 %v95
    %248 = vmatpush.msra.mxu0 %v94
    %249 = vmatpush.msra.mxu0 %v93
    %250 = vmatpush.msra.mxu0 %v92
    %251 = vmatpush.msra.mxu0 %v91
    %252 = vmatpush.msra.mxu0 %v90
    %253 = vmatpush.msra.mxu0 %v89
    %254 = vmatpush.msra.mxu0 %v88
    %255 = vmatpush.msra.mxu0 %v87
    %256 = vmatpush.msra.mxu0 %v86
    %257 = vmatpush.msra.mxu0 %v85
    %258 = vmatpush.msra.mxu0 %v84
    %259 = vmatpush.msra.mxu0 %v83
    %260 = vmatpush.msra.mxu0 %v82
    %261 = vmatpush.msra.mxu0 %v81
    %262 = vmatmul.f32.gmra.mxu0 %v173
    %v263 = vpop.f32.mrf.mxu0
    %v264 = vadd.f32 %v244, %v263
    %265 = vdwg.mxu0
    %266 = vmatpush.msra.mxu0 %v112
    %267 = vmatpush.msra.mxu0 %v111
    %268 = vmatpush.msra.mxu0 %v110
    %269 = vmatpush.msra.mxu0 %v109
    %270 = vmatpush.msra.mxu0 %v108
    %271 = vmatpush.msra.mxu0 %v107
    %272 = vmatpush.msra.mxu0 %v106
    %273 = vmatpush.msra.mxu0 %v105
    %274 = vmatpush.msra.mxu0 %v104
    %275 = vmatpush.msra.mxu0 %v103
    %276 = vmatpush.msra.mxu0 %v102
    %277 = vmatpush.msra.mxu0 %v101
    %278 = vmatpush.msra.mxu0 %v100
    %279 = vmatpush.msra.mxu0 %v99
    %280 = vmatpush.msra.mxu0 %v98
    %281 = vmatpush.msra.mxu0 %v97
    %282 = vmatmul.f32.gmra.mxu0 %v174
    %v283 = vpop.f32.mrf.mxu0
    %v284 = vadd.f32 %v264, %v283
    %285 = vdwg.mxu0
    %286 = vmatpush.msra.mxu0 %v128
    %287 = vmatpush.msra.mxu0 %v127
    %288 = vmatpush.msra.mxu0 %v126
    %289 = vmatpush.msra.mxu0 %v125
    %290 = vmatpush.msra.mxu0 %v124
    %291 = vmatpush.msra.mxu0 %v123
    %292 = vmatpush.msra.mxu0 %v122
    %293 = vmatpush.msra.mxu0 %v121
    %294 = vmatpush.msra.mxu0 %v120
    %295 = vmatpush.msra.mxu0 %v119
    %296 = vmatpush.msra.mxu0 %v118
    %297 = vmatpush.msra.mxu0 %v117
    %298 = vmatpush.msra.mxu0 %v116
    %299 = vmatpush.msra.mxu0 %v115
    %300 = vmatpush.msra.mxu0 %v114
    %301 = vmatpush.msra.mxu0 %v113
    %302 = vmatmul.f32.gmra.mxu0 %v175
    %v303 = vpop.f32.mrf.mxu0
    %v304 = vadd.f32 %v284, %v303
    %305 = vdwg.mxu0
    %306 = vmatpush.msra.mxu0 %v144
    %307 = vmatpush.msra.mxu0 %v143
    %308 = vmatpush.msra.mxu0 %v142
    %309 = vmatpush.msra.mxu0 %v141
    %310 = vmatpush.msra.mxu0 %v140
    %311 = vmatpush.msra.mxu0 %v139
    %312 = vmatpush.msra.mxu0 %v138
    %313 = vmatpush.msra.mxu0 %v137
    %314 = vmatpush.msra.mxu0 %v136
    %315 = vmatpush.msra.mxu0 %v135
    %316 = vmatpush.msra.mxu0 %v134
    %317 = vmatpush.msra.mxu0 %v133
    %318 = vmatpush.msra.mxu0 %v132
    %319 = vmatpush.msra.mxu0 %v131
    %320 = vmatpush.msra.mxu0 %v130
    %321 = vmatpush.msra.mxu0 %v129
    %322 = vmatmul.f32.gmra.mxu0 %v176
    %v323 = vpop.f32.mrf.mxu0
    %v324 = vadd.f32 %v304, %v323
    %325 = vdwg.mxu0
    %326 = vmatpush.msra.mxu0 %v160
    %327 = vmatpush.msra.mxu0 %v159
    %328 = vmatpush.msra.mxu0 %v158
    %329 = vmatpush.msra.mxu0 %v157
    %330 = vmatpush.msra.mxu0 %v156
    %331 = vmatpush.msra.mxu0 %v155
    %332 = vmatpush.msra.mxu0 %v154
    %333 = vmatpush.msra.mxu0 %v153
    %334 = vmatpush.msra.mxu0 %v152
    %335 = vmatpush.msra.mxu0 %v151
    %336 = vmatpush.msra.mxu0 %v150
    %337 = vmatpush.msra.mxu0 %v149
    %338 = vmatpush.msra.mxu0 %v148
    %339 = vmatpush.msra.mxu0 %v147
    %340 = vmatpush.msra.mxu0 %v146
    %341 = vmatpush.msra.mxu0 %v145
    %342 = vmatmul.f32.gmra.mxu0 %v177
    %v343 = vpop.f32.mrf.mxu0
    %v344 = vadd.f32 %v324, %v343
    %345 = vdwg.mxu0
    %v346 = vmul.f32 %v344, %v344
    %vm347 = vcmask 1041408
    %v348 = vsel %vm347, %v346, 0.0
    %349 = vadd.xlane.f32.xlu0 %v348
    %v350 = vpop.xlane.xlu0 %349
    %vm351 = vcmp.gt.f32.partialorder %v350, 1e-24
    %v352 = vrsqrt.pop %v350
    %v353 = vmul.f32 %v352, %v350
    %v354 = vmul.f32 %v353, %v352
    %v355 = vmul.f32 0.5, %v354
    %v356 = vsub.f32 1.5, %v355
    %v357 = vmul.f32 %v352, %v356
    %vm358 = vweird.f32 %v350
    %vm359 = vweird.f32 %v352
    %vm360 = vmor %vm358, %vm359
    %v361 = vsel %vm360, %v352, %v357
    %v362 = vsel %vm351, %v361, 1e+12
    %v363 = vmul.f32 %v344, %v362
    %364 = vst [vmem:[#allocation5] sm:$0x3] %v363
    // Predicated region
    $region18: #{wrapped_distortion_facenet.1} parent=1 // pred_check
      _
    $region19: #{wrapped_distortion_facenet.1} parent=1 // pred_check_branch
      %366 = sbr.rel (0) target = $region21
    $region20: #{wrapped_distortion_facenet.1} parent=1 // pred_region
      %368 = vsyncadd [#allocation4], 0
      %s370 = sshll.u32 [#allocation5], 4
      %s371 = int_to_ptr.vmem [resolvable:$true] %s370
      %s372 = sshll.u32 %s3, 4
      %s373 = int_to_ptr.hbm [resolvable:$true] %s372
      %375 = dma.vmem_to_hbm [thread:$0]  %s371, 32, %s373, [#allocation4]
    $region21: #{wrapped_distortion_facenet.1} parent=1 // pred_fallthru
      _
    // Predicated region
    $region22: #{wrapped_distortion_facenet.1} parent=1 // pred_check
      _
    $region23: #{wrapped_distortion_facenet.1} parent=1 // pred_check_branch
      %377 = sbr.rel (0) target = $region25
    $region24: #{wrapped_distortion_facenet.1} parent=1 // pred_region
      %379 = dma.done [#allocation4], 32
    $region25: #{wrapped_distortion_facenet.1} parent=1 // pred_fallthru
      _
    %380 = vsyncpa [#allocation3], 1
    %381 = vsyncpa [#allocation4], 1

</llo_original>
